<compile_context>
chip_gen: v6e
topology: v6e:2x2x1
jax: 0.10.0
libtpu: 0.0.40
codegen_flags: <defaults>
</compile_context>

<pallas_src>
import functools

import jax
import jax.numpy as jnp
from jax import lax
from jax.experimental import pallas as pl
from jax.experimental.pallas import tpu as pltpu


def _round_up(x, m):
    return -(-x // m) * m


def _write_partial(out_ref, partial):
    """Store a scalar partial sum into a lane-dense (1, 1, 128) output block."""
    lane = lax.broadcasted_iota(jnp.int32, (1, 1, 128), 2)
    out_ref[...] = jnp.where(lane == 0, partial, 0.0)


def _row_mask(pid, block_rows, n_rows):
    """(block_rows, 1) bool mask of rows that are inside the true batch."""
    row_ids = pid * block_rows + lax.broadcasted_iota(
        jnp.int32, (block_rows, 1), 0)
    return row_ids < n_rows


def _distill_kl_cls_kernel(ys_ref, yt_ref, out_ref, *,
                           inv_t, n_rows, block_rows, compute_dtype):
    pid = pl.program_id(0)
    cdt = compute_dtype

    # Per-element scale / shift / exp in the compute dtype (bf16 on v6e/v7x
    # when the inputs are bf16, f32 otherwise).
    ys = ys_ref[...].astype(cdt) * inv_t
    yt = yt_ref[...].astype(cdt) * inv_t
    ys_sh = ys - jnp.max(ys, axis=-1, keepdims=True)
    yt_sh = yt - jnp.max(yt, axis=-1, keepdims=True)
    ys_e = jnp.exp(ys_sh)
    yt_e = jnp.exp(yt_sh)

    # Per-row lane reductions with f32 accumulation.
    log_z = jnp.log(jnp.sum(ys_e.astype(jnp.float32), axis=-1, keepdims=True))
    denom = jnp.sum(yt_e.astype(jnp.float32), axis=-1, keepdims=True)
    dot = jnp.sum((yt_e * ys_sh).astype(jnp.float32), axis=-1, keepdims=True)

    # Algebraic rewrite (log_p_s is never materialized):
    #   -sum(p_t * log_p_s) = logZ_s - sum(yt_e * ys_sh) / sum(yt_e)
    per_row = log_z - dot * pl.reciprocal(denom, approx=False)   # (TB, 1) f32

    # Mask rows of the (possibly out-of-bounds) last tile BEFORE the tile sum.
    per_row = jnp.where(_row_mask(pid, block_rows, n_rows), per_row, 0.0)
    _write_partial(out_ref, jnp.sum(per_row))


def _distill_kl_reg_kernel(ys_ref, yt_ref, out_ref, *, n_rows, block_rows):
    pid = pl.program_id(0)
    # 1/T^2 is folded into the final scalar divisor in the wrapper, so no
    # per-element scaling is needed.  f32 compute avoids bf16 cancellation on
    # close student/teacher logits.
    d = ys_ref[...].astype(jnp.float32) - yt_ref[...].astype(jnp.float32)
    per_row = jnp.sum(d * d, axis=-1, keepdims=True)             # (TB, 1)
    per_row = jnp.where(_row_mask(pid, block_rows, n_rows), per_row, 0.0)
    _write_partial(out_ref, jnp.sum(per_row))


def _tpu_vmem_budget():
    """Generation-aware (vmem_limit_bytes, target_per_input_tile_bytes)."""
    try:
        vmem_cap = int(pltpu.get_tpu_info().vmem_capacity_bytes)
    except Exception:
        vmem_cap = 64 * 1024 * 1024       # conservative (v7x-sized) fallback
    # Scoped limit: 3/4 of physical VMEM, capped at 64 MiB.
    #   v5e/v6e (128 MiB physical) -> 64 MiB;  v7x (64 MiB) -> 48 MiB.
    vmem_limit = min(64 * 1024 * 1024, (vmem_cap * 3) // 4)
    # Budget ~12 tile-equivalents: 2 inputs x 2 pipeline buffers + ~3 live
    # f32 (rows, C) intermediates (2x a bf16 tile each) + output/slack.
    target_tile_bytes = max(512 * 1024, vmem_limit // 12)
    return vmem_limit, target_tile_bytes


def _pre_v6_device():
    """True on chips without bf16 VALU/EUP (v5e and earlier) or if unknown."""
    try:
        kind = jax.devices()[0].device_kind.lower()
    except Exception:
        return True
    return any(tag in kind for tag in ("v2", "v3", "v4", "v5"))


def distill_kl(y_s, y_t, temperature, mode="classification", *,
               block_rows=None, compute_dtype=None):
    """Pallas implementation of DistillKL.forward. Returns a float32 scalar."""
    assert y_s.shape == y_t.shape
    n_classes = y_s.shape[-1]
    ys2 = y_s.reshape(-1, n_classes)
    yt2 = y_t.reshape(-1, n_classes)
    n_rows = ys2.shape[0]
    itemsize = jnp.dtype(ys2.dtype).itemsize

    vmem_limit, target_tile_bytes = _tpu_vmem_budget()

    # Sublane packing multiple for the streamed dtype (f32: 8, bf16: 16).
    sub_mult = max(8, 32 // itemsize)
    if block_rows is None:
        tb = (target_tile_bytes // (n_classes * itemsize)) // sub_mult * sub_mult
        tb = max(sub_mult, tb)
        # Keep >= 2 (roughly even) grid steps when the batch allows it so the
        # "parallel" axis can be split across v7x's two TensorCores.
        tb = min(tb, max(sub_mult, _round_up(-(-n_rows // 2), sub_mult)))
        block_rows = int(min(tb, _round_up(n_rows, sub_mult)))
    else:
        # Respect the user's request but round up to the sublane multiple so
        # the (8, 128) block constraint holds.
        block_rows = int(_round_up(max(1, int(block_rows)), sub_mult))
    num_tiles = -(-n_rows // block_rows)

    if compute_dtype is None:
        if ys2.dtype == jnp.bfloat16 and not _pre_v6_device():
            compute_dtype = jnp.bfloat16   # bf16 VPU/EUP exist on v6e/v7x
        else:
            compute_dtype = jnp.float32

    if mode == "regression":
        kernel = functools.partial(
            _distill_kl_reg_kernel, n_rows=n_rows, block_rows=block_rows)
        flops = 3 * n_rows * n_classes
        transcendentals = 0
    else:
        kernel = functools.partial(
            _distill_kl_cls_kernel, inv_t=1.0 / float(temperature),
            n_rows=n_rows, block_rows=block_rows, compute_dtype=compute_dtype)
        flops = 8 * n_rows * n_classes
        transcendentals = 2 * n_rows * n_classes

    partials = pl.pallas_call(
        kernel,
        out_shape=jax.ShapeDtypeStruct((num_tiles, 1, 128), jnp.float32),
        grid=(num_tiles,),
        in_specs=[
            pl.BlockSpec((block_rows, n_classes), lambda i: (i, 0)),
            pl.BlockSpec((block_rows, n_classes), lambda i: (i, 0)),
        ],
        out_specs=pl.BlockSpec((1, 1, 128), lambda i: (i, 0, 0)),
        compiler_params=pltpu.CompilerParams(
            dimension_semantics=("parallel",),
            vmem_limit_bytes=vmem_limit,
        ),
        cost_estimate=pl.CostEstimate(
            flops=flops,
            transcendentals=transcendentals,
            bytes_accessed=2 * n_rows * n_classes * itemsize
            + num_tiles * 128 * 4,
        ),
    )(ys2, yt2)

    total = jnp.sum(partials)
    if mode == "regression":
        return total / float(n_rows * n_classes * float(temperature) ** 2)
    return total / float(n_rows)


if __name__ == "__main__":
    key = jax.random.PRNGKey(0)
    k1, k2 = jax.random.split(key)
    T = 4.0

    # --- small f32 case (single tile, f32 compute path) --------------------
    batch, n_classes = 8, 32
    y_s = jax.random.normal(k1, (batch, n_classes), dtype=jnp.float32)
    y_t = jax.random.normal(k2, (batch, n_classes), dtype=jnp.float32)

    loss = jax.block_until_ready(distill_kl(y_s, y_t, T, mode="classification"))
    log_p_s = jax.nn.log_softmax(y_s / T, axis=-1)
    p_t = jax.nn.softmax(y_t / T, axis=-1)
    ref = jnp.mean(-jnp.sum(p_t * log_p_s, axis=-1))
    assert jnp.allclose(loss, ref, rtol=1e-5, atol=1e-6), (loss, ref)

    loss_reg = jax.block_until_ready(distill_kl(y_s, y_t, T, mode="regression"))
    ref_reg = jnp.mean(((y_s / T) - (y_t / T)) ** 2)
    assert jnp.allclose(loss_reg, ref_reg, rtol=1e-5, atol=1e-6), (loss_reg, ref_reg)

    # --- multi-tile bf16 case with a masked (partial) last tile ------------
    # (bf16 compute path on v6e/v7x -> use a looser tolerance; v5e falls back
    # to f32 compute and matches much tighter.)
    k3, k4 = jax.random.split(k2)
    batch2, n_classes2 = 40, 128
    y_s2 = jax.random.normal(k3, (batch2, n_classes2), dtype=jnp.bfloat16)
    y_t2 = jax.random.normal(k4, (batch2, n_classes2), dtype=jnp.bfloat16)
    ys_f = y_s2.astype(jnp.float32)
    yt_f = y_t2.astype(jnp.float32)
    log_p_s2 = jax.nn.log_softmax(ys_f / T, axis=-1)
    p_t2 = jax.nn.softmax(yt_f / T, axis=-1)
    ref2 = jnp.mean(-jnp.sum(p_t2 * log_p_s2, axis=-1))

    # auto block_rows (megacore clamp -> 2 tiles, last one masked)
    loss2a = jax.block_until_ready(
        distill_kl(y_s2, y_t2, T, mode="classification"))
    assert jnp.allclose(loss2a, ref2, rtol=5e-3, atol=1e-3), (loss2a, ref2)

    # explicit block_rows (3 tiles: 16 + 16 + masked 8)
    loss2b = jax.block_until_ready(
        distill_kl(y_s2, y_t2, T, mode="classification", block_rows=16))
    assert jnp.allclose(loss2b, ref2, rtol=5e-3, atol=1e-3), (loss2b, ref2)

    loss2_reg = jax.block_until_ready(
        distill_kl(y_s2, y_t2, T, mode="regression", block_rows=16))
    ref2_reg = jnp.mean(((ys_f / T) - (yt_f / T)) ** 2)
    assert jnp.allclose(loss2_reg, ref2_reg, rtol=1e-4, atol=1e-5), (loss2_reg, ref2_reg)

    print("KERNEL_OK")
</pallas_src>

<mosaic_0001>
module attributes {stable_mosaic.version = 11 : i64} {
  func.func @_distill_kl_cls_kernel(%arg0: i32, %arg1: memref<8x32xf32, #tpu.memory_space<vmem>>, %arg2: memref<8x32xf32, #tpu.memory_space<vmem>>, %arg3: memref<1x1x128xf32, #tpu.memory_space<vmem>>) attributes {dimension_semantics = [#tpu.dimension_semantics<parallel>], iteration_bounds = array<i64: 1>, scalar_prefetch = 0 : i64, scratch_operands = 0 : i64, tpu.core_type = #tpu.core_type<tc>, window_params = [{transform_indices = @transform_0, window_bounds = array<i64: 8, 32>}, {transform_indices = @transform_1, window_bounds = array<i64: 8, 32>}, {transform_indices = @transform_2, window_bounds = array<i64: 1, 1, 128>}]} {
    %c0 = arith.constant 0 : index
    %c0_0 = arith.constant 0 : index
    %0 = vector.load %arg1[%c0, %c0_0] : memref<8x32xf32, #tpu.memory_space<vmem>>, vector<8x32xf32>
    %cst = arith.constant 2.500000e-01 : f32
    %1 = vector.broadcast %cst : f32 to vector<8x32xf32>
    %2 = arith.mulf %0, %1 : vector<8x32xf32>
    %c0_1 = arith.constant 0 : index
    %c0_2 = arith.constant 0 : index
    %3 = vector.load %arg2[%c0_1, %c0_2] : memref<8x32xf32, #tpu.memory_space<vmem>>, vector<8x32xf32>
    %cst_3 = arith.constant 2.500000e-01 : f32
    %4 = vector.broadcast %cst_3 : f32 to vector<8x32xf32>
    %5 = arith.mulf %3, %4 : vector<8x32xf32>
    %cst_4 = arith.constant dense<0xFF800000> : vector<8xf32>
    %6 = vector.multi_reduction <maximumf>, %2, %cst_4 [1] : vector<8x32xf32> to vector<8xf32>
    %7 = vector.shape_cast %6 : vector<8xf32> to vector<8x1xf32>
    %8 = vector.broadcast %7 : vector<8x1xf32> to vector<8x32xf32>
    %9 = arith.subf %2, %8 : vector<8x32xf32>
    %cst_5 = arith.constant dense<0xFF800000> : vector<8xf32>
    %10 = vector.multi_reduction <maximumf>, %5, %cst_5 [1] : vector<8x32xf32> to vector<8xf32>
    %11 = vector.shape_cast %10 : vector<8xf32> to vector<8x1xf32>
    %12 = vector.broadcast %11 : vector<8x1xf32> to vector<8x32xf32>
    %13 = arith.subf %5, %12 : vector<8x32xf32>
    %14 = math.exp %9 : vector<8x32xf32>
    %15 = math.exp %13 : vector<8x32xf32>
    %cst_6 = arith.constant dense<0.000000e+00> : vector<8xf32>
    %16 = vector.multi_reduction <add>, %14, %cst_6 [1] : vector<8x32xf32> to vector<8xf32>
    %17 = vector.shape_cast %16 : vector<8xf32> to vector<8x1xf32>
    %18 = math.log %17 : vector<8x1xf32>
    %cst_7 = arith.constant dense<0.000000e+00> : vector<8xf32>
    %19 = vector.multi_reduction <add>, %15, %cst_7 [1] : vector<8x32xf32> to vector<8xf32>
    %20 = vector.shape_cast %19 : vector<8xf32> to vector<8x1xf32>
    %21 = arith.mulf %15, %9 : vector<8x32xf32>
    %cst_8 = arith.constant dense<0.000000e+00> : vector<8xf32>
    %22 = vector.multi_reduction <add>, %21, %cst_8 [1] : vector<8x32xf32> to vector<8xf32>
    %23 = vector.shape_cast %22 : vector<8xf32> to vector<8x1xf32>
    %24 = tpu.reciprocal %20 : vector<8x1xf32> -> vector<8x1xf32>
    %25 = arith.mulf %23, %24 : vector<8x1xf32>
    %26 = arith.subf %18, %25 : vector<8x1xf32>
    %c8_i32 = arith.constant 8 : i32
    %27 = arith.muli %arg0, %c8_i32 : i32
    %28 = tpu.iota {dimensions = array<i32: 0>} : vector<8x1xi32>
    %29 = vector.broadcast %27 : i32 to vector<8x1xi32>
    %30 = arith.addi %29, %28 : vector<8x1xi32>
    %c8_i32_9 = arith.constant 8 : i32
    %31 = vector.broadcast %c8_i32_9 : i32 to vector<8x1xi32>
    %32 = arith.cmpi slt, %30, %31 : vector<8x1xi32>
    %cst_10 = arith.constant 0.000000e+00 : f32
    %33 = vector.broadcast %cst_10 : f32 to vector<8x1xf32>
    %34 = arith.select %32, %26, %33 : vector<8x1xi1>, vector<8x1xf32>
    %35 = vector.shape_cast %34 : vector<8x1xf32> to vector<1x8x1xf32>
    %cst_11 = arith.constant dense<0.000000e+00> : vector<1xf32>
    %36 = vector.multi_reduction <add>, %35, %cst_11 [1, 2] : vector<1x8x1xf32> to vector<1xf32>
    %37 = vector.shape_cast %36 : vector<1xf32> to vector<1x1x1xf32>
    %38 = vector.extract %37[0, 0, 0] : f32 from vector<1x1x1xf32>
    %39 = tpu.iota {dimensions = array<i32: 2>} : vector<1x1x128xi32>
    %c0_i32 = arith.constant 0 : i32
    %40 = vector.broadcast %c0_i32 : i32 to vector<1x1x128xi32>
    %41 = arith.cmpi eq, %39, %40 : vector<1x1x128xi32>
    %cst_12 = arith.constant 0.000000e+00 : f32
    %42 = vector.broadcast %38 : f32 to vector<1x1x128xf32>
    %43 = vector.broadcast %cst_12 : f32 to vector<1x1x128xf32>
    %44 = arith.select %41, %42, %43 : vector<1x1x128xi1>, vector<1x1x128xf32>
    %c0_13 = arith.constant 0 : index
    %c0_14 = arith.constant 0 : index
    %c0_15 = arith.constant 0 : index
    %45 = vector.load %arg3[%c0_13, %c0_14, %c0_15] : memref<1x1x128xf32, #tpu.memory_space<vmem>>, vector<1x1x128xf32>
    tpu.vector_store %arg3[%c0_13, %c0_14, %c0_15], %44 {strides = array<i32>} : memref<1x1x128xf32, #tpu.memory_space<vmem>>, vector<1x1x128xf32>,
    return
  }
  func.func @transform_0(%arg0: i32) -> (i32, i32) {
    %c0_i32 = arith.constant 0 : i32
    %c0_i32_0 = arith.constant 0 : i32
    return %arg0, %c0_i32 : i32, i32
  }
  func.func @transform_1(%arg0: i32) -> (i32, i32) {
    %c0_i32 = arith.constant 0 : i32
    %c0_i32_0 = arith.constant 0 : i32
    return %arg0, %c0_i32 : i32, i32
  }
  func.func @transform_2(%arg0: i32) -> (i32, i32, i32) {
    %c0_i32 = arith.constant 0 : i32
    %c0_i32_0 = arith.constant 0 : i32
    %c0_i32_1 = arith.constant 0 : i32
    return %arg0, %c0_i32, %c0_i32_0 : i32, i32, i32
  }
}

</mosaic_0001>

<llo_original>
// kernel: tpu_custom_call.1
$region0: #{tpu_custom_call.1}
  #allocation0 [shape = 'u32[]', space=smem, size = 0x4, offset = 0x4, fixed_abs, tag = 'smem constant byte address 0x4 - core index']
  #allocation1 [shape = 'u32[144,128]{1,0:T(1,128)}', space=vmem, size = 0x12000, scoped, tag = 'internal scratch']
  %s0 = inlined_call_operand.hbm [shape: f32[8,32], index: 0, kind: input, shape index: {}]
  %s1 = inlined_call_operand.hbm [shape: f32[8,32], index: 1, kind: input, shape index: {}]
  %s2 = inlined_call_operand.hbm [shape: f32[1,1,128], index: 2, kind: output, shape index: {}]
  %s3 = sld [smem:[#allocation0]]
  $region26: #{tpu_custom_call.1} parent=0
    _
  %s5 = ssub.s32 1, %s3
  %s6 = scalar_select 0, %s5, %s3
  $region1: #{tpu_custom_call.1} parent=0
    #allocation2 [shape = 'u8[4096]{0}', space=vmem, size = 0x1000, scoped, tag = 'input window, operand 0, single buffered']
    #allocation3 [shape = 's32[1]{0}', space=sflag, size = 0x4, scoped, tag = 'scoped memory for tpu_custom_call.1']
    #allocation4 [shape = 's32[1]{0}', space=sflag, size = 0x4, scoped, tag = 'scoped memory for tpu_custom_call.1']
    #allocation5 [shape = 'u8[4096]{0}', space=vmem, size = 0x1000, scoped, tag = 'input window, operand 1, single buffered']
    #allocation6 [shape = 's32[1]{0}', space=sflag, size = 0x4, scoped, tag = 'scoped memory for tpu_custom_call.1']
    #allocation7 [shape = 'u8[512]{0}', space=vmem, size = 0x400, scoped, tag = 'output window, operand 0, single buffered']
    %7 = vsyncpa [#allocation3], 0
    %8 = vsyncpa [#allocation6], 0
    %9 = vsyncpa [#allocation4], 0
    // Predicated region
    $region2: #{tpu_custom_call.1} parent=1 // pred_check
      _
    $region3: #{tpu_custom_call.1} parent=1 // pred_check_branch
      %11 = sbr.rel (0) target = $region5
    $region4: #{tpu_custom_call.1} parent=1 // pred_region
      %s13 = ssub.s32 128, 128
      %14 = vsyncadd [#allocation3], %s13
      %s16 = sshll.u32 [#allocation2], 4
      %s17 = int_to_ptr.vmem [resolvable:$true] %s16
      %19 = dma.hbm_to_vmem [thread:$0]  %s0, 128, %s17, [#allocation3]
    $region5: #{tpu_custom_call.1} parent=1 // pred_fallthru
      _
    // Predicated region
    $region6: #{tpu_custom_call.1} parent=1 // pred_check
      _
    $region7: #{tpu_custom_call.1} parent=1 // pred_check_branch
      %21 = sbr.rel (0) target = $region9
    $region8: #{tpu_custom_call.1} parent=1 // pred_region
      %s23 = ssub.s32 128, 128
      %24 = vsyncadd [#allocation6], %s23
      %s26 = sshll.u32 [#allocation5], 4
      %s27 = int_to_ptr.vmem [resolvable:$true] %s26
      %29 = dma.hbm_to_vmem [thread:$0]  %s1, 128, %s27, [#allocation6]
    $region9: #{tpu_custom_call.1} parent=1 // pred_fallthru
      _
    // Predicated region
    $region10: #{tpu_custom_call.1} parent=1 // pred_check
      _
    $region11: #{tpu_custom_call.1} parent=1 // pred_check_branch
      %31 = sbr.rel (0) target = $region13
    $region12: #{tpu_custom_call.1} parent=1 // pred_region
      %32 = dma.done [#allocation3], 128
    $region13: #{tpu_custom_call.1} parent=1 // pred_fallthru
      _
    // Predicated region
    $region14: #{tpu_custom_call.1} parent=1 // pred_check
      _
    $region15: #{tpu_custom_call.1} parent=1 // pred_check_branch
      %34 = sbr.rel (0) target = $region17
    $region16: #{tpu_custom_call.1} parent=1 // pred_region
      %35 = dma.done [#allocation6], 128
    $region17: #{tpu_custom_call.1} parent=1 // pred_fallthru
      _
    %v36 = vld [vmem:[#allocation2] sm:$0xff]
    %v37 = vmul.f32 %v36, 0.25
    %v38 = vld [vmem:[#allocation5] sm:$0xff]
    %v39 = vmul.f32 %v38, 0.25
    %vm40 = vcmask 261120
    %v41 = vsel %vm40, %v37, -inf
    %42 = vmax.xlane.f32.xlu0 %v41
    %v43 = vpop.xlane.xlu0 %42
    %v44 = vsub.f32 %v37, %v43
    %v45 = vsel %vm40, %v39, -inf
    %46 = vmax.xlane.f32.xlu0 %v45
    %v47 = vpop.xlane.xlu0 %46
    %v48 = vsub.f32 %v39, %v47
    %v49 = vmul.f32 %v44, 1.442695
    %v50 = vpow.pop %v49
    %v51 = vmul.f32 %v48, 1.442695
    %v52 = vpow.pop %v51
    %v53 = vsel %vm40, %v50, 0.0
    %54 = vadd.xlane.f32.xlu0 %v53
    %v55 = vpop.xlane.xlu0 %54
    %v56 = vlog2.pop %v55
    %v57 = vmul.f32 %v56, 0.6931472
    %v58 = vsel %vm40, %v52, 0.0
    %59 = vadd.xlane.f32.xlu0 %v58
    %v60 = vpop.xlane.xlu0 %59
    %v61 = vmul.f32 %v52, %v44
    %v62 = vsel %vm40, %v61, 0.0
    %63 = vadd.xlane.f32.xlu0 %v62
    %v64 = vpop.xlane.xlu0 %63
    %v65 = vrcp.pop %v60
    %v66 = vmul.f32 %v64, %v65
    %v67 = vsub.f32 %v57, %v66
    %s68 = smul.u32 0, 8
    %v69 = vlaneseq
    %v70 = vshrl.u32 %v69, 7
    %v71 = vstv %s68
    %v72 = vadd.s32 %v71, %v70
    %vm73 = vcmp.lt.s32.totalorder %v72, 8
    %v74 = vsel %vm73, %v67, 0.0
    %vm75 = vcmask 7168
    %v76 = vsel %vm75, %v74, 0.0
    %77 = vadd.xlane.f32.xlu0 %v76
    %v78 = vpop.xlane.xlu0 %77
    %v79 = vrot.slane %v78, 4
    %v80 = vadd.f32 %v78, %v79
    %v81 = vrot.slane %v80, 2
    %v82 = vadd.f32 %v80, %v81
    %v83 = vrot.slane %v82, 1
    %v84 = vadd.f32 %v82, %v83
    %s85 = vtos %v84
    %v86 = vlaneseq
    %v87 = vand.u32 %v86, 127
    %vm88 = vcmp.eq.s32.totalorder %v87, 0
    %v89 = vstv %s85
    %v90 = vsel %vm88, %v89, 0.0
    %91 = vst [vmem:[#allocation7] sm:$0x1] %v90
    // Predicated region
    $region18: #{tpu_custom_call.1} parent=1 // pred_check
      _
    $region19: #{tpu_custom_call.1} parent=1 // pred_check_branch
      %93 = sbr.rel (0) target = $region21
    $region20: #{tpu_custom_call.1} parent=1 // pred_region
      %s95 = ssub.s32 16, 16
      %96 = vsyncadd [#allocation4], %s95
      %s98 = sshll.u32 [#allocation7], 4
      %s99 = int_to_ptr.vmem [resolvable:$true] %s98
      %101 = dma.vmem_to_hbm [thread:$0]  %s99, 16, %s2, [#allocation4]
    $region21: #{tpu_custom_call.1} parent=1 // pred_fallthru
      _
    // Predicated region
    $region22: #{tpu_custom_call.1} parent=1 // pred_check
      _
    $region23: #{tpu_custom_call.1} parent=1 // pred_check_branch
      %103 = sbr.rel (0) target = $region25
    $region24: #{tpu_custom_call.1} parent=1 // pred_region
      %104 = dma.done [#allocation4], 16
    $region25: #{tpu_custom_call.1} parent=1 // pred_fallthru
      _
    %105 = vsyncpa [#allocation3], 1
    %106 = vsyncpa [#allocation6], 1
    %107 = vsyncpa [#allocation4], 1

</llo_original>
